<compile_context>
chip_gen: v7x
topology: tpu7x:2x2x1
jax: 0.10.0
libtpu: 0.0.40
codegen_flags: <defaults>
</compile_context>

<pallas_src>
from typing import NamedTuple, Sequence

import numpy as np
import jax
import jax.numpy as jnp
from jax.experimental import pallas as pl
from jax.experimental.pallas import tpu as pltpu


def _round_up(n: int, m: int) -> int:
    return ((n + m - 1) // m) * m


def _vmem_budget_bytes() -> int:
    """Usable VMEM budget: physical capacity with headroom (conservative default)."""
    try:
        cap = int(pltpu.get_tpu_info().vmem_capacity_bytes)
    except Exception:
        cap = 64 << 20  # v7x has the smallest physical VMEM per TensorCore
    return int(cap * 0.7)


# --------------------------------------------------------------------------- #
# One-time weight preparation (cast + zero-pad to 128-lane multiples).
# --------------------------------------------------------------------------- #
class PreparedWeights(NamedTuple):
    padded: tuple          # tuple of (pdims[i], pdims[i+1]) arrays, compute_dtype
    dims: tuple            # original (input_dim, out_0, ..., out_{L-1})
    pdims: tuple           # padded dims (multiples of 128)
    compute_dtype: np.dtype


def prepare_deep_linear_weights(weights: Sequence[jax.Array],
                                compute_dtype=jnp.float32) -> PreparedWeights:
    """Cast + zero-pad the factor matrices ONCE (exact: zero padding).

    Do this outside the training/inference step so the per-call forward does
    not re-read all weights and re-write padded copies to HBM.
    """
    compute_dtype = np.dtype(compute_dtype)
    dims = (int(weights[0].shape[0]),) + tuple(int(w.shape[1]) for w in weights)
    pdims = tuple(_round_up(d, 128) for d in dims)
    padded = []
    for i, w in enumerate(weights):
        wp = jnp.asarray(w).astype(compute_dtype)
        pad_r = pdims[i] - wp.shape[0]
        pad_c = pdims[i + 1] - wp.shape[1]
        if pad_r or pad_c:
            wp = jnp.pad(wp, ((0, pad_r), (0, pad_c)))
        padded.append(wp)
    return PreparedWeights(tuple(padded), dims, pdims, compute_dtype)


# --------------------------------------------------------------------------- #
# Kernels
# --------------------------------------------------------------------------- #
def _chain_kernel(*refs):
    """refs = (x_ref, w0_ref, ..., w_{L-1}_ref, out_ref).

    y_tile = ((x_tile @ W0) @ W1) ... @ W_{L-1}.
    Operands stay in compute_dtype; MXU accumulation is always f32.
    """
    x_ref = refs[0]
    w_refs = refs[1:-1]
    o_ref = refs[-1]

    y = x_ref[...]
    for w_ref in w_refs:
        y = jnp.dot(y.astype(w_ref.dtype), w_ref[...],
                    preferred_element_type=jnp.float32)
    o_ref[...] = y.astype(o_ref.dtype)


def _matmul_kernel(a_ref, b_ref, o_ref, acc_ref):
    """Standard tiled matmul with f32 VMEM accumulator over the K grid axis."""
    @pl.when(pl.program_id(2) == 0)
    def _():
        acc_ref[...] = jnp.zeros_like(acc_ref)
    acc_ref[...] += jnp.dot(a_ref[...], b_ref[...],
                            preferred_element_type=jnp.float32)
    o_ref[...] = acc_ref[...].astype(o_ref.dtype)


def _pick_tile(dim_padded: int, preferred: int = 512) -> int:
    for t in (preferred, 256, 128):
        if t <= dim_padded and dim_padded % t == 0:
            return t
    return dim_padded


def _tiled_matmul(a, b, out_dtype, *, tm):
    """One layer of the fallback path: a (M,K) @ b (K,N), all dims pre-padded."""
    M, K = a.shape
    _, N = b.shape
    tk = _pick_tile(K)
    tn = _pick_tile(N)
    out_dtype = np.dtype(out_dtype)
    flops = 2 * M * K * N
    bytes_accessed = (a.size * a.dtype.itemsize + b.size * b.dtype.itemsize
                      + M * N * out_dtype.itemsize)
    return pl.pallas_call(
        _matmul_kernel,
        out_shape=jax.ShapeDtypeStruct((M, N), out_dtype),
        grid=(M // tm, N // tn, K // tk),
        in_specs=[pl.BlockSpec((tm, tk), lambda i, j, k: (i, k)),
                  pl.BlockSpec((tk, tn), lambda i, j, k: (k, j))],
        out_specs=pl.BlockSpec((tm, tn), lambda i, j, k: (i, j)),
        scratch_shapes=[pltpu.VMEM((tm, tn), jnp.float32)],
        compiler_params=pltpu.CompilerParams(
            dimension_semantics=("parallel", "parallel", "arbitrary")),
        cost_estimate=pl.CostEstimate(flops=flops, transcendentals=0,
                                      bytes_accessed=bytes_accessed),
    )(a, b)


def _resident_forward(xp, prepared: PreparedWeights, tm, out_dtype, vmem_limit):
    """Whole-chain kernel with all (padded) weights resident in VMEM."""
    pbatch, pK = xp.shape
    pdims = prepared.pdims
    out_dtype = np.dtype(out_dtype)
    grid = (pbatch // tm,)

    flops = 2 * pbatch * sum(pdims[i] * pdims[i + 1] for i in range(len(pdims) - 1))
    bytes_accessed = (xp.size * xp.dtype.itemsize
                      + sum(w.size * w.dtype.itemsize for w in prepared.padded)
                      + pbatch * pdims[-1] * out_dtype.itemsize)
    cost = pl.CostEstimate(flops=flops, transcendentals=0,
                           bytes_accessed=bytes_accessed)

    out_shape = jax.ShapeDtypeStruct((pbatch, pdims[-1]), out_dtype)
    x_spec = pl.BlockSpec((tm, pK), lambda i: (i, 0))
    out_spec = pl.BlockSpec((tm, pdims[-1]), lambda i: (i, 0))

    def run(weight_pipeline_mode):
        in_specs = [x_spec]
        for w in prepared.padded:
            if weight_pipeline_mode is None:
                in_specs.append(pl.BlockSpec(w.shape, lambda i: (0, 0)))
            else:
                # Constant index_map => block never changes; single-buffer it.
                in_specs.append(pl.BlockSpec(w.shape, lambda i: (0, 0),
                                             pipeline_mode=weight_pipeline_mode))
        return pl.pallas_call(
            _chain_kernel,
            out_shape=out_shape,
            grid=grid,
            in_specs=in_specs,
            out_specs=out_spec,
            compiler_params=pltpu.CompilerParams(
                dimension_semantics=("parallel",),   # batch tiles independent
                vmem_limit_bytes=int(vmem_limit)),
            cost_estimate=cost,
        )(xp, *prepared.padded)

    try:
        return run(pl.Buffered(1))
    except Exception:
        # Older jax without BlockSpec pipeline_mode: default double-buffering.
        return run(None)


# --------------------------------------------------------------------------- #
# Public forward
# --------------------------------------------------------------------------- #
def deep_linear_net_forward(x, weights, *, compute_dtype=jnp.float32,
                            block_batch=256, out_dtype=None,
                            force_tiled=False):
    """DeepLinearNet forward: y = x @ (W0 @ W1 @ ... @ W_{L-1}).

    x:        (batch, input_dim) array.
    weights:  list of (in_i, out_i) factor matrices, OR a PreparedWeights pack
              from prepare_deep_linear_weights() (preferred: prepare once and
              reuse so weights are not re-cast/re-padded every call).
    compute_dtype: MXU operand dtype. float32 (default) matches the PyTorch
              module's precision; bfloat16 halves weight/activation DMA while
              keeping f32 MXU accumulation. Ignored if a PreparedWeights pack
              is passed (its dtype wins).
    out_dtype: output dtype (default: x.dtype). Pass bf16 to halve output
              store traffic when downstream tolerates it.
    force_tiled: force the per-layer tiled fallback (used automatically when
              the padded weights don't fit resident in VMEM, e.g. v7x 64 MiB).
    """
    if not isinstance(weights, PreparedWeights):
        weights = prepare_deep_linear_weights(weights, compute_dtype)
    prepared = weights
    compute_dtype = prepared.compute_dtype
    out_dtype = np.dtype(x.dtype) if out_dtype is None else np.dtype(out_dtype)

    batch, input_dim = x.shape
    if input_dim != prepared.dims[0]:
        raise ValueError("x feature dim does not match W0 input dim")
    output_dim = prepared.dims[-1]
    pdims = prepared.pdims

    # ---- batch tile: multiple of 16 (bf16 sublane pack; also covers f32),
    #      split into >=2 grid steps when cheaply possible (v7x: 2 TCs). ----
    tm = max(16, (min(block_batch, _round_up(batch, 16)) // 16) * 16)
    pbatch = _round_up(batch, tm)
    if pbatch // tm < 2 and pbatch >= 32 and (pbatch // 2) % 16 == 0:
        tm = pbatch // 2

    # ---- resident vs tiled decision from actual VMEM footprint ----
    wbytes = sum(w.size * w.dtype.itemsize for w in prepared.padded)
    tile_bytes = (2 * tm * pdims[0] * compute_dtype.itemsize        # x tile x2
                  + 2 * tm * pdims[-1] * out_dtype.itemsize         # out tile x2
                  + 2 * tm * max(pdims) * 4)                        # f32 intermediates
    resident_need = wbytes + tile_bytes
    budget = _vmem_budget_bytes()
    use_resident = (not force_tiled) and (int(resident_need * 1.25) <= budget)

    if use_resident:
        need_x_pad = (pbatch != batch or pdims[0] != input_dim
                      or np.dtype(x.dtype) != compute_dtype)
        if need_x_pad:
            xp = jnp.zeros((pbatch, pdims[0]), compute_dtype)
            xp = xp.at[:batch, :input_dim].set(x.astype(compute_dtype))
        else:
            xp = x
        vmem_limit = min(max(int(resident_need * 1.25), 32 << 20), budget)
        out_padded = _resident_forward(xp, prepared, tm, out_dtype, vmem_limit)
    else:
        # Per-layer tiled fallback: each layer streamed through the MXU with a
        # K-reduction grid axis; intermediates round-trip HBM in compute_dtype.
        # TODO(synk): fuse the per-layer fallback into one multi-layer pipelined kernel.
        tm_t = max(16, (min(256, _round_up(batch, 16)) // 16) * 16)
        pbatch_t = _round_up(batch, tm_t)
        if (pbatch_t != batch or pdims[0] != input_dim
                or np.dtype(x.dtype) != compute_dtype):
            xp = jnp.zeros((pbatch_t, pdims[0]), compute_dtype)
            xp = xp.at[:batch, :input_dim].set(x.astype(compute_dtype))
        else:
            xp = x
        y = xp
        n_layers = len(prepared.padded)
        for li, w in enumerate(prepared.padded):
            layer_out_dtype = out_dtype if li == n_layers - 1 else compute_dtype
            y = _tiled_matmul(y, w, layer_out_dtype, tm=tm_t)
        out_padded = y

    if out_padded.shape == (batch, output_dim):
        return out_padded
    return out_padded[:batch, :output_dim]


def init_deep_linear_net(key, input_dim, output_dim, hidden_dims, alpha=1e-7):
    """'normal' init matching DeepLinearNet.__initialize_new_layer:
    each factor is randn(in, out) * alpha."""
    dims = [input_dim] + list(hidden_dims) + [output_dim]
    weights = []
    for i in range(len(dims) - 1):
        key, sub = jax.random.split(key)
        w = jax.random.normal(sub, (dims[i], dims[i + 1]), dtype=jnp.float32) * alpha
        weights.append(w)
    return weights


if __name__ == "__main__":
    # Small shapes consistent with the module's forward.
    batch = 8
    input_dim = 32
    hidden_dims = [64, 48]
    output_dim = 16
    alpha = 1e-7

    key = jax.random.PRNGKey(0)
    key, xkey = jax.random.split(key)
    x = jax.random.normal(xkey, (batch, input_dim), dtype=jnp.float32)
    weights = init_deep_linear_net(key, input_dim, output_dim, hidden_dims, alpha)

    # Module-faithful reference (prod-first chain), computed in float64 on host
    # so it is independent of TPU matmul precision defaults.
    prod64 = np.asarray(weights[0], dtype=np.float64)
    for w in weights[1:]:
        prod64 = prod64 @ np.asarray(w, dtype=np.float64)
    y_ref = np.asarray(x, dtype=np.float64) @ prod64
    scale = float(np.max(np.abs(y_ref))) + 1e-30

    # --- resident-weights path, f32 operands (default; module-faithful) ---
    prep_f32 = prepare_deep_linear_weights(weights, jnp.float32)   # pad/cast once
    y = deep_linear_net_forward(x, prep_f32)
    jax.block_until_ready(y)
    assert y.shape == (batch, output_dim)
    assert np.allclose(np.asarray(y, dtype=np.float64), y_ref,
                       rtol=2e-2, atol=2e-2 * scale), "f32 resident path mismatch"

    # --- per-layer tiled fallback (what large configs on v7x would use) ---
    y_tiled = deep_linear_net_forward(x, prep_f32, force_tiled=True)
    jax.block_until_ready(y_tiled)
    assert np.allclose(np.asarray(y_tiled), np.asarray(y),
                       rtol=1e-3, atol=1e-3 * scale), "tiled path != resident path"

    # --- optional bf16 operands (f32 MXU accumulation), loose tolerance ---
    prep_bf16 = prepare_deep_linear_weights(weights, jnp.bfloat16)
    y_bf16 = deep_linear_net_forward(x, prep_bf16)
    jax.block_until_ready(y_bf16)
    assert np.allclose(np.asarray(y_bf16, dtype=np.float64), y_ref,
                       rtol=1e-1, atol=1e-1 * scale), "bf16 resident path mismatch"

    print("KERNEL_OK")
</pallas_src>

<mosaic_0001>
module attributes {stable_mosaic.version = 11 : i64} {
  func.func @_chain_kernel(%arg0: i32, %arg1: memref<16x128xf32, #tpu.memory_space<vmem>>, %arg2: memref<128x128xf32, #tpu.memory_space<vmem>>, %arg3: memref<128x128xf32, #tpu.memory_space<vmem>>, %arg4: memref<128x128xf32, #tpu.memory_space<vmem>>, %arg5: memref<16x128xf32, #tpu.memory_space<vmem>>) attributes {dimension_semantics = [#tpu.dimension_semantics<parallel>], iteration_bounds = array<i64: 1>, scalar_prefetch = 0 : i64, scratch_operands = 0 : i64, tpu.core_type = #tpu.core_type<tc>, window_params = [{transform_indices = @transform_0, window_bounds = array<i64: 16, 128>}, {pipeline_mode = #tpu.pipeline_mode<synchronous>, transform_indices = @transform_1, window_bounds = array<i64: 128, 128>}, {pipeline_mode = #tpu.pipeline_mode<synchronous>, transform_indices = @transform_2, window_bounds = array<i64: 128, 128>}, {pipeline_mode = #tpu.pipeline_mode<synchronous>, transform_indices = @transform_3, window_bounds = array<i64: 128, 128>}, {transform_indices = @transform_4, window_bounds = array<i64: 16, 128>}]} {
    %c0 = arith.constant 0 : index
    %c0_0 = arith.constant 0 : index
    %0 = vector.load %arg1[%c0, %c0_0] : memref<16x128xf32, #tpu.memory_space<vmem>>, vector<16x128xf32>
    %c0_1 = arith.constant 0 : index
    %c0_2 = arith.constant 0 : index
    %1 = vector.load %arg2[%c0_1, %c0_2] : memref<128x128xf32, #tpu.memory_space<vmem>>, vector<128x128xf32>
    %cst = arith.constant dense<0.000000e+00> : vector<16x128xf32>
    %2 = tpu.matmul %0, %1, %cst {dimension_numbers = #tpu.dot_dimension_numbers<[1], [0], [0], [1], [0, 0, 1, 1], [], []>} : vector<16x128xf32>, vector<128x128xf32>, vector<16x128xf32> -> vector<16x128xf32>
    %c0_3 = arith.constant 0 : index
    %c0_4 = arith.constant 0 : index
    %3 = vector.load %arg3[%c0_3, %c0_4] : memref<128x128xf32, #tpu.memory_space<vmem>>, vector<128x128xf32>
    %cst_5 = arith.constant dense<0.000000e+00> : vector<16x128xf32>
    %4 = tpu.matmul %2, %3, %cst_5 {dimension_numbers = #tpu.dot_dimension_numbers<[1], [0], [0], [1], [0, 0, 1, 1], [], []>} : vector<16x128xf32>, vector<128x128xf32>, vector<16x128xf32> -> vector<16x128xf32>
    %c0_6 = arith.constant 0 : index
    %c0_7 = arith.constant 0 : index
    %5 = vector.load %arg4[%c0_6, %c0_7] : memref<128x128xf32, #tpu.memory_space<vmem>>, vector<128x128xf32>
    %cst_8 = arith.constant dense<0.000000e+00> : vector<16x128xf32>
    %6 = tpu.matmul %4, %5, %cst_8 {dimension_numbers = #tpu.dot_dimension_numbers<[1], [0], [0], [1], [0, 0, 1, 1], [], []>} : vector<16x128xf32>, vector<128x128xf32>, vector<16x128xf32> -> vector<16x128xf32>
    %c0_9 = arith.constant 0 : index
    %c0_10 = arith.constant 0 : index
    %7 = vector.load %arg5[%c0_9, %c0_10] : memref<16x128xf32, #tpu.memory_space<vmem>>, vector<16x128xf32>
    tpu.vector_store %arg5[%c0_9, %c0_10], %6 {strides = array<i32>} : memref<16x128xf32, #tpu.memory_space<vmem>>, vector<16x128xf32>,
    return
  }
  func.func @transform_0(%arg0: i32) -> (i32, i32) {
    %c0_i32 = arith.constant 0 : i32
    %c0_i32_0 = arith.constant 0 : i32
    return %arg0, %c0_i32 : i32, i32
  }
  func.func @transform_1(%arg0: i32) -> (i32, i32) {
    %c0_i32 = arith.constant 0 : i32
    %c0_i32_0 = arith.constant 0 : i32
    %c0_i32_1 = arith.constant 0 : i32
    return %c0_i32, %c0_i32_0 : i32, i32
  }
  func.func @transform_2(%arg0: i32) -> (i32, i32) {
    %c0_i32 = arith.constant 0 : i32
    %c0_i32_0 = arith.constant 0 : i32
    %c0_i32_1 = arith.constant 0 : i32
    return %c0_i32, %c0_i32_0 : i32, i32
  }
  func.func @transform_3(%arg0: i32) -> (i32, i32) {
    %c0_i32 = arith.constant 0 : i32
    %c0_i32_0 = arith.constant 0 : i32
    %c0_i32_1 = arith.constant 0 : i32
    return %c0_i32, %c0_i32_0 : i32, i32
  }
  func.func @transform_4(%arg0: i32) -> (i32, i32) {
    %c0_i32 = arith.constant 0 : i32
    %c0_i32_0 = arith.constant 0 : i32
    return %arg0, %c0_i32 : i32, i32
  }
}

module attributes {stable_mosaic.version = 11 : i64} {
  func.func @_chain_kernel(%arg0: i32, %arg1: memref<16x128xf32, #tpu.memory_space<vmem>>, %arg2: memref<128x128xf32, #tpu.memory_space<vmem>>, %arg3: memref<128x128xf32, #tpu.memory_space<vmem>>, %arg4: memref<128x128xf32, #tpu.memory_space<vmem>>, %arg5: memref<16x128xf32, #tpu.memory_space<vmem>>) attributes {dimension_semantics = [#tpu.dimension_semantics<parallel>], iteration_bounds = array<i64: 1>, scalar_prefetch = 0 : i64, scratch_operands = 0 : i64, tpu.core_type = #tpu.core_type<tc>, window_params = [{transform_indices = @transform_0, window_bounds = array<i64: 16, 128>}, {pipeline_mode = #tpu.pipeline_mode<synchronous>, transform_indices = @transform_1, window_bounds = array<i64: 128, 128>}, {pipeline_mode = #tpu.pipeline_mode<synchronous>, transform_indices = @transform_2, window_bounds = array<i64: 128, 128>}, {pipeline_mode = #tpu.pipeline_mode<synchronous>, transform_indices = @transform_3, window_bounds = array<i64: 128, 128>}, {transform_indices = @transform_4, window_bounds = array<i64: 16, 128>}]} {
    %c0 = arith.constant 0 : index
    %c0_0 = arith.constant 0 : index
    %0 = vector.load %arg1[%c0, %c0_0] : memref<16x128xf32, #tpu.memory_space<vmem>>, vector<16x128xf32>
    %c0_1 = arith.constant 0 : index
    %c0_2 = arith.constant 0 : index
    %1 = vector.load %arg2[%c0_1, %c0_2] : memref<128x128xf32, #tpu.memory_space<vmem>>, vector<128x128xf32>
    %cst = arith.constant dense<0.000000e+00> : vector<16x128xf32>
    %2 = tpu.matmul %0, %1, %cst {dimension_numbers = #tpu.dot_dimension_numbers<[1], [0], [0], [1], [0, 0, 1, 1], [], []>} : vector<16x128xf32>, vector<128x128xf32>, vector<16x128xf32> -> vector<16x128xf32>
    %c0_3 = arith.constant 0 : index
    %c0_4 = arith.constant 0 : index
    %3 = vector.load %arg3[%c0_3, %c0_4] : memref<128x128xf32, #tpu.memory_space<vmem>>, vector<128x128xf32>
    %cst_5 = arith.constant dense<0.000000e+00> : vector<16x128xf32>
    %4 = tpu.matmul %2, %3, %cst_5 {dimension_numbers = #tpu.dot_dimension_numbers<[1], [0], [0], [1], [0, 0, 1, 1], [], []>} : vector<16x128xf32>, vector<128x128xf32>, vector<16x128xf32> -> vector<16x128xf32>
    %c0_6 = arith.constant 0 : index
    %c0_7 = arith.constant 0 : index
    %5 = vector.load %arg4[%c0_6, %c0_7] : memref<128x128xf32, #tpu.memory_space<vmem>>, vector<128x128xf32>
    %cst_8 = arith.constant dense<0.000000e+00> : vector<16x128xf32>
    %6 = tpu.matmul %4, %5, %cst_8 {dimension_numbers = #tpu.dot_dimension_numbers<[1], [0], [0], [1], [0, 0, 1, 1], [], []>} : vector<16x128xf32>, vector<128x128xf32>, vector<16x128xf32> -> vector<16x128xf32>
    %c0_9 = arith.constant 0 : index
    %c0_10 = arith.constant 0 : index
    %7 = vector.load %arg5[%c0_9, %c0_10] : memref<16x128xf32, #tpu.memory_space<vmem>>, vector<16x128xf32>
    tpu.vector_store %arg5[%c0_9, %c0_10], %6 {strides = array<i32>} : memref<16x128xf32, #tpu.memory_space<vmem>>, vector<16x128xf32>,
    return
  }
  func.func @transform_0(%arg0: i32) -> (i32, i32) {
    %c0_i32 = arith.constant 0 : i32
    %c0_i32_0 = arith.constant 0 : i32
    return %arg0, %c0_i32 : i32, i32
  }
  func.func @transform_1(%arg0: i32) -> (i32, i32) {
    %c0_i32 = arith.constant 0 : i32
    %c0_i32_0 = arith.constant 0 : i32
    %c0_i32_1 = arith.constant 0 : i32
    return %c0_i32, %c0_i32_0 : i32, i32
  }
  func.func @transform_2(%arg0: i32) -> (i32, i32) {
    %c0_i32 = arith.constant 0 : i32
    %c0_i32_0 = arith.constant 0 : i32
    %c0_i32_1 = arith.constant 0 : i32
    return %c0_i32, %c0_i32_0 : i32, i32
  }
  func.func @transform_3(%arg0: i32) -> (i32, i32) {
    %c0_i32 = arith.constant 0 : i32
    %c0_i32_0 = arith.constant 0 : i32
    %c0_i32_1 = arith.constant 0 : i32
    return %c0_i32, %c0_i32_0 : i32, i32
  }
  func.func @transform_4(%arg0: i32) -> (i32, i32) {
    %c0_i32 = arith.constant 0 : i32
    %c0_i32_0 = arith.constant 0 : i32
    return %arg0, %c0_i32 : i32, i32
  }
}

</mosaic_0001>

<llo_original>
// kernel: tpu_custom_call.1
$region0: #{tpu_custom_call.1}
  #allocation0 [shape = 'u32[]', space=smem, size = 0x4, offset = 0x4, fixed_abs, tag = 'smem constant byte address 0x4 - core index']
  #allocation1 [shape = 'u32[144,128]{1,0:T(1,128)}', space=vmem, size = 0x12000, scoped, tag = 'internal scratch']
  %s0 = inlined_call_operand.hbm [shape: f32[16,128], index: 0, kind: input, shape index: {}]
  %s1 = inlined_call_operand.hbm [shape: f32[128,128], index: 1, kind: input, shape index: {}]
  %s2 = inlined_call_operand.hbm [shape: f32[128,128], index: 2, kind: input, shape index: {}]
  %s3 = inlined_call_operand.hbm [shape: f32[128,128], index: 3, kind: input, shape index: {}]
  %s4 = inlined_call_operand.hbm [shape: f32[16,128], index: 4, kind: output, shape index: {}]
  %s5 = sld [smem:[#allocation0]]
  $region42: #{tpu_custom_call.1} parent=0
    _
  %s7 = ssub.s32 1, %s5
  %s8 = scalar_select 0, %s7, %s5
  $region1: #{tpu_custom_call.1} parent=0
    #allocation2 [shape = 'u8[8192]{0}', space=vmem, size = 0x2000, scoped, tag = 'input window, operand 0, single buffered']
    #allocation3 [shape = 's32[1]{0}', space=sflag, size = 0x4, scoped, tag = 'scoped memory for tpu_custom_call.1']
    #allocation4 [shape = 's32[1]{0}', space=sflag, size = 0x4, scoped, tag = 'scoped memory for tpu_custom_call.1']
    #allocation5 [shape = 'u8[65536]{0}', space=vmem, size = 0x10000, scoped, tag = 'input window, operand 1, single buffered']
    #allocation6 [shape = 's32[1]{0}', space=sflag, size = 0x4, scoped, tag = 'scoped memory for tpu_custom_call.1']
    #allocation7 [shape = 'u8[65536]{0}', space=vmem, size = 0x10000, scoped, tag = 'input window, operand 2, single buffered']
    #allocation8 [shape = 'u8[65536]{0}', space=vmem, size = 0x10000, scoped, tag = 'input window, operand 3, single buffered']
    #allocation9 [shape = 's32[1]{0}', space=sflag, size = 0x4, scoped, tag = 'scoped memory for tpu_custom_call.1']
    #allocation10 [shape = 'u8[8192]{0}', space=vmem, size = 0x2000, scoped, tag = 'output window, operand 0, single buffered']
    %9 = vsyncpa [#allocation3], 0
    %10 = vsyncpa [#allocation6], 0
    %11 = vsyncpa [#allocation9], 0
    %12 = vsyncpa [#allocation4], 0
    // Predicated region
    $region2: #{tpu_custom_call.1} parent=1 // pred_check
      _
    $region3: #{tpu_custom_call.1} parent=1 // pred_check_branch
      %14 = sbr.rel (0) target = $region5
    $region4: #{tpu_custom_call.1} parent=1 // pred_region
      %s16 = ssub.s32 256, 256
      %17 = vsyncadd [#allocation3], %s16
      %s18 = sshll.u32 [#allocation2], 4
      %s19 = int_to_ptr.vmem [resolvable:$true] %s18
      %24 = dma.hbm_to_vmem [thread:$0]  %s0, 256, %s19, [#allocation3], 128, 128, 8
    $region5: #{tpu_custom_call.1} parent=1 // pred_fallthru
      _
    // Predicated region
    $region6: #{tpu_custom_call.1} parent=1 // pred_check
      _
    $region7: #{tpu_custom_call.1} parent=1 // pred_check_branch
      %26 = sbr.rel (0) target = $region9
    $region8: #{tpu_custom_call.1} parent=1 // pred_region
      %s28 = ssub.s32 2048, 2048
      %29 = vsyncadd [#allocation6], %s28
      %s30 = sshll.u32 [#allocation5], 4
      %s31 = int_to_ptr.vmem [resolvable:$true] %s30
      %36 = dma.hbm_to_vmem [thread:$0]  %s1, 2048, %s31, [#allocation6], 128, 128, 8
    $region9: #{tpu_custom_call.1} parent=1 // pred_fallthru
      _
    // Predicated region
    $region10: #{tpu_custom_call.1} parent=1 // pred_check
      _
    $region11: #{tpu_custom_call.1} parent=1 // pred_check_branch
      %38 = sbr.rel (0) target = $region13
    $region12: #{tpu_custom_call.1} parent=1 // pred_region
      %s40 = ssub.s32 2048, 2048
      %41 = vsyncadd [#allocation6], %s40
      %s42 = sshll.u32 [#allocation7], 4
      %s43 = int_to_ptr.vmem [resolvable:$true] %s42
      %48 = dma.hbm_to_vmem [thread:$0]  %s2, 2048, %s43, [#allocation6], 128, 128, 8
    $region13: #{tpu_custom_call.1} parent=1 // pred_fallthru
      _
    // Predicated region
    $region14: #{tpu_custom_call.1} parent=1 // pred_check
      _
    $region15: #{tpu_custom_call.1} parent=1 // pred_check_branch
      %50 = sbr.rel (0) target = $region17
    $region16: #{tpu_custom_call.1} parent=1 // pred_region
      %s52 = ssub.s32 2048, 2048
      %53 = vsyncadd [#allocation9], %s52
      %s54 = sshll.u32 [#allocation8], 4
      %s55 = int_to_ptr.vmem [resolvable:$true] %s54
      %60 = dma.hbm_to_vmem [thread:$0]  %s3, 2048, %s55, [#allocation9], 128, 128, 8
    $region17: #{tpu_custom_call.1} parent=1 // pred_fallthru
      _
    // Predicated region
    $region18: #{tpu_custom_call.1} parent=1 // pred_check
      _
    $region19: #{tpu_custom_call.1} parent=1 // pred_check_branch
      %62 = sbr.rel (0) target = $region21
    $region20: #{tpu_custom_call.1} parent=1 // pred_region
      %63 = dma.done [#allocation3], 256
    $region21: #{tpu_custom_call.1} parent=1 // pred_fallthru
      _
    // Predicated region
    $region22: #{tpu_custom_call.1} parent=1 // pred_check
      _
    $region23: #{tpu_custom_call.1} parent=1 // pred_check_branch
      %65 = sbr.rel (0) target = $region25
    $region24: #{tpu_custom_call.1} parent=1 // pred_region
      %66 = dma.done [#allocation6], 2048
    $region25: #{tpu_custom_call.1} parent=1 // pred_fallthru
      _
    // Predicated region
    $region26: #{tpu_custom_call.1} parent=1 // pred_check
      _
    $region27: #{tpu_custom_call.1} parent=1 // pred_check_branch
      %68 = sbr.rel (0) target = $region29
    $region28: #{tpu_custom_call.1} parent=1 // pred_region
      %69 = dma.done [#allocation6], 2048
    $region29: #{tpu_custom_call.1} parent=1 // pred_fallthru
      _
    // Predicated region
    $region30: #{tpu_custom_call.1} parent=1 // pred_check
      _
    $region31: #{tpu_custom_call.1} parent=1 // pred_check_branch
      %71 = sbr.rel (0) target = $region33
    $region32: #{tpu_custom_call.1} parent=1 // pred_region
      %72 = dma.done [#allocation9], 2048
    $region33: #{tpu_custom_call.1} parent=1 // pred_fallthru
      _
    %v73 = vld [vmem:[#allocation2] sm:$0xff]
    %v74 = vld [vmem:[#allocation2 + $0x8] sm:$0xff]
    %v75 = vld [vmem:[#allocation5] sm:$0xff]
    %v76 = vld [vmem:[#allocation5 + $0x8] sm:$0xff]
    %v77 = vld [vmem:[#allocation5 + $0x10] sm:$0xff]
    %v78 = vld [vmem:[#allocation5 + $0x18] sm:$0xff]
    %v79 = vld [vmem:[#allocation5 + $0x20] sm:$0xff]
    %v80 = vld [vmem:[#allocation5 + $0x28] sm:$0xff]
    %v81 = vld [vmem:[#allocation5 + $0x30] sm:$0xff]
    %v82 = vld [vmem:[#allocation5 + $0x38] sm:$0xff]
    %v83 = vld [vmem:[#allocation5 + $0x40] sm:$0xff]
    %v84 = vld [vmem:[#allocation5 + $0x48] sm:$0xff]
    %v85 = vld [vmem:[#allocation5 + $0x50] sm:$0xff]
    %v86 = vld [vmem:[#allocation5 + $0x58] sm:$0xff]
    %v87 = vld [vmem:[#allocation5 + $0x60] sm:$0xff]
    %v88 = vld [vmem:[#allocation5 + $0x68] sm:$0xff]
    %v89 = vld [vmem:[#allocation5 + $0x70] sm:$0xff]
    %v90 = vld [vmem:[#allocation5 + $0x78] sm:$0xff]
    %91 = vmatprep.subr.mxu0 0.0
    %92 = vmatpush1.msra.mxu0 %v75
    %93 = vmatprep.subr.mxu0 0.0
    %94 = vmatpush1.msra.mxu0 %v76
    %95 = vmatprep.subr.mxu0 0.0
    %96 = vmatpush1.msra.mxu0 %v77
    %97 = vmatprep.subr.mxu0 0.0
    %98 = vmatpush1.msra.mxu0 %v78
    %99 = vmatprep.subr.mxu0 0.0
    %100 = vmatpush1.msra.mxu0 %v79
    %101 = vmatprep.subr.mxu0 0.0
    %102 = vmatpush1.msra.mxu0 %v80
    %103 = vmatprep.subr.mxu0 0.0
    %104 = vmatpush1.msra.mxu0 %v81
    %105 = vmatprep.subr.mxu0 0.0
    %106 = vmatpush1.msra.mxu0 %v82
    %107 = vmatprep.subr.mxu0 0.0
    %108 = vmatpush1.msra.mxu0 %v83
    %109 = vmatprep.subr.mxu0 0.0
    %110 = vmatpush1.msra.mxu0 %v84
    %111 = vmatprep.subr.mxu0 0.0
    %112 = vmatpush1.msra.mxu0 %v85
    %113 = vmatprep.subr.mxu0 0.0
    %114 = vmatpush1.msra.mxu0 %v86
    %115 = vmatprep.subr.mxu0 0.0
    %116 = vmatpush1.msra.mxu0 %v87
    %117 = vmatprep.subr.mxu0 0.0
    %118 = vmatpush1.msra.mxu0 %v88
    %119 = vmatprep.subr.mxu0 0.0
    %120 = vmatpush1.msra.mxu0 %v89
    %121 = vmatprep.subr.mxu0 0.0
    %122 = vmatpush1.msra.mxu0 %v90
    %123 = vmatprep.subr.mxu0 0.0
    %124 = vmatpush1.msra.mxu0 0.0
    %125 = vmatprep.subr.mxu0 0.0
    %126 = vmatpush1.msra.mxu0 0.0
    %127 = vmatprep.subr.mxu0 0.0
    %128 = vmatpush1.msra.mxu0 0.0
    %129 = vmatprep.subr.mxu0 0.0
    %130 = vmatpush1.msra.mxu0 0.0
    %131 = vmatprep.subr.mxu0 0.0
    %132 = vmatpush1.msra.mxu0 0.0
    %133 = vmatprep.subr.mxu0 0.0
    %134 = vmatpush1.msra.mxu0 0.0
    %135 = vmatprep.subr.mxu0 0.0
    %136 = vmatpush1.msra.mxu0 0.0
    %137 = vmatprep.subr.mxu0 0.0
    %138 = vmatpush1.msra.mxu0 0.0
    %139 = vmatprep.subr.mxu0 0.0
    %140 = vmatpush1.msra.mxu0 0.0
    %141 = vmatprep.subr.mxu0 0.0
    %142 = vmatpush1.msra.mxu0 0.0
    %143 = vmatprep.subr.mxu0 0.0
    %144 = vmatpush1.msra.mxu0 0.0
    %145 = vmatprep.subr.mxu0 0.0
    %146 = vmatpush1.msra.mxu0 0.0
    %147 = vmatprep.subr.mxu0 0.0
    %148 = vmatpush1.msra.mxu0 0.0
    %149 = vmatprep.subr.mxu0 0.0
    %150 = vmatpush1.msra.mxu0 0.0
    %151 = vmatprep.subr.mxu0 0.0
    %152 = vmatpush1.msra.mxu0 0.0
    %153 = vmatprep.subr.mxu0 0.0
    %154 = vmatpush1.msra.mxu0 0.0
    %155 = vmatprep.mubr.f32.mxu0 0.0
    %156 = vmatmul.mubr.f32.gmra.mrb[0].mxu0 %v73
    %v157 = vpop.f32.mrb[0].mxu0
    %v158 = vadd.f32 0.0, %v157
    %v159 = vpop.f32.mrb[0].mxu0
    %160 = vmatprep.mubr.f32.mxu0 0.0
    %161 = vmatmul.mubr.f32.gmra.mrb[0].mxu0 %v74
    %v162 = vpop.f32.mrb[0].mxu0
    %v163 = vadd.f32 0.0, %v162
    %v164 = vpop.f32.mrb[0].mxu0
    %165 = vdwg.mxu0
    %v166 = vld [vmem:[#allocation7] sm:$0xff]
    %v167 = vld [vmem:[#allocation7 + $0x8] sm:$0xff]
    %v168 = vld [vmem:[#allocation7 + $0x10] sm:$0xff]
    %v169 = vld [vmem:[#allocation7 + $0x18] sm:$0xff]
    %v170 = vld [vmem:[#allocation7 + $0x20] sm:$0xff]
    %v171 = vld [vmem:[#allocation7 + $0x28] sm:$0xff]
    %v172 = vld [vmem:[#allocation7 + $0x30] sm:$0xff]
    %v173 = vld [vmem:[#allocation7 + $0x38] sm:$0xff]
    %v174 = vld [vmem:[#allocation7 + $0x40] sm:$0xff]
    %v175 = vld [vmem:[#allocation7 + $0x48] sm:$0xff]
    %v176 = vld [vmem:[#allocation7 + $0x50] sm:$0xff]
    %v177 = vld [vmem:[#allocation7 + $0x58] sm:$0xff]
    %v178 = vld [vmem:[#allocation7 + $0x60] sm:$0xff]
    %v179 = vld [vmem:[#allocation7 + $0x68] sm:$0xff]
    %v180 = vld [vmem:[#allocation7 + $0x70] sm:$0xff]
    %v181 = vld [vmem:[#allocation7 + $0x78] sm:$0xff]
    %182 = vmatprep.subr.mxu0 0.0
    %183 = vmatpush1.msra.mxu0 %v166
    %184 = vmatprep.subr.mxu0 0.0
    %185 = vmatpush1.msra.mxu0 %v167
    %186 = vmatprep.subr.mxu0 0.0
    %187 = vmatpush1.msra.mxu0 %v168
    %188 = vmatprep.subr.mxu0 0.0
    %189 = vmatpush1.msra.mxu0 %v169
    %190 = vmatprep.subr.mxu0 0.0
    %191 = vmatpush1.msra.mxu0 %v170
    %192 = vmatprep.subr.mxu0 0.0
    %193 = vmatpush1.msra.mxu0 %v171
    %194 = vmatprep.subr.mxu0 0.0
    %195 = vmatpush1.msra.mxu0 %v172
    %196 = vmatprep.subr.mxu0 0.0
    %197 = vmatpush1.msra.mxu0 %v173
    %198 = vmatprep.subr.mxu0 0.0
    %199 = vmatpush1.msra.mxu0 %v174
    %200 = vmatprep.subr.mxu0 0.0
    %201 = vmatpush1.msra.mxu0 %v175
    %202 = vmatprep.subr.mxu0 0.0
    %203 = vmatpush1.msra.mxu0 %v176
    %204 = vmatprep.subr.mxu0 0.0
    %205 = vmatpush1.msra.mxu0 %v177
    %206 = vmatprep.subr.mxu0 0.0
    %207 = vmatpush1.msra.mxu0 %v178
    %208 = vmatprep.subr.mxu0 0.0
    %209 = vmatpush1.msra.mxu0 %v179
    %210 = vmatprep.subr.mxu0 0.0
    %211 = vmatpush1.msra.mxu0 %v180
    %212 = vmatprep.subr.mxu0 0.0
    %213 = vmatpush1.msra.mxu0 %v181
    %214 = vmatprep.subr.mxu0 0.0
    %215 = vmatpush1.msra.mxu0 0.0
    %216 = vmatprep.subr.mxu0 0.0
    %217 = vmatpush1.msra.mxu0 0.0
    %218 = vmatprep.subr.mxu0 0.0
    %219 = vmatpush1.msra.mxu0 0.0
    %220 = vmatprep.subr.mxu0 0.0
    %221 = vmatpush1.msra.mxu0 0.0
    %222 = vmatprep.subr.mxu0 0.0
    %223 = vmatpush1.msra.mxu0 0.0
    %224 = vmatprep.subr.mxu0 0.0
    %225 = vmatpush1.msra.mxu0 0.0
    %226 = vmatprep.subr.mxu0 0.0
    %227 = vmatpush1.msra.mxu0 0.0
    %228 = vmatprep.subr.mxu0 0.0
    %229 = vmatpush1.msra.mxu0 0.0
    %230 = vmatprep.subr.mxu0 0.0
    %231 = vmatpush1.msra.mxu0 0.0
    %232 = vmatprep.subr.mxu0 0.0
    %233 = vmatpush1.msra.mxu0 0.0
    %234 = vmatprep.subr.mxu0 0.0
    %235 = vmatpush1.msra.mxu0 0.0
    %236 = vmatprep.subr.mxu0 0.0
    %237 = vmatpush1.msra.mxu0 0.0
    %238 = vmatprep.subr.mxu0 0.0
    %239 = vmatpush1.msra.mxu0 0.0
    %240 = vmatprep.subr.mxu0 0.0
    %241 = vmatpush1.msra.mxu0 0.0
    %242 = vmatprep.subr.mxu0 0.0
    %243 = vmatpush1.msra.mxu0 0.0
    %244 = vmatprep.subr.mxu0 0.0
    %245 = vmatpush1.msra.mxu0 0.0
    %246 = vmatprep.mubr.f32.mxu0 0.0
    %247 = vmatmul.mubr.f32.gmra.mrb[0].mxu0 %v158
    %v248 = vpop.f32.mrb[0].mxu0
    %v249 = vadd.f32 0.0, %v248
    %v250 = vpop.f32.mrb[0].mxu0
    %251 = vmatprep.mubr.f32.mxu0 0.0
    %252 = vmatmul.mubr.f32.gmra.mrb[0].mxu0 %v163
    %v253 = vpop.f32.mrb[0].mxu0
    %v254 = vadd.f32 0.0, %v253
    %v255 = vpop.f32.mrb[0].mxu0
    %256 = vdwg.mxu0
    %v257 = vld [vmem:[#allocation8] sm:$0xff]
    %v258 = vld [vmem:[#allocation8 + $0x8] sm:$0xff]
    %v259 = vld [vmem:[#allocation8 + $0x10] sm:$0xff]
    %v260 = vld [vmem:[#allocation8 + $0x18] sm:$0xff]
    %v261 = vld [vmem:[#allocation8 + $0x20] sm:$0xff]
    %v262 = vld [vmem:[#allocation8 + $0x28] sm:$0xff]
    %v263 = vld [vmem:[#allocation8 + $0x30] sm:$0xff]
    %v264 = vld [vmem:[#allocation8 + $0x38] sm:$0xff]
    %v265 = vld [vmem:[#allocation8 + $0x40] sm:$0xff]
    %v266 = vld [vmem:[#allocation8 + $0x48] sm:$0xff]
    %v267 = vld [vmem:[#allocation8 + $0x50] sm:$0xff]
    %v268 = vld [vmem:[#allocation8 + $0x58] sm:$0xff]
    %v269 = vld [vmem:[#allocation8 + $0x60] sm:$0xff]
    %v270 = vld [vmem:[#allocation8 + $0x68] sm:$0xff]
    %v271 = vld [vmem:[#allocation8 + $0x70] sm:$0xff]
    %v272 = vld [vmem:[#allocation8 + $0x78] sm:$0xff]
    %273 = vmatprep.subr.mxu0 0.0
    %274 = vmatpush1.msra.mxu0 %v257
    %275 = vmatprep.subr.mxu0 0.0
    %276 = vmatpush1.msra.mxu0 %v258
    %277 = vmatprep.subr.mxu0 0.0
    %278 = vmatpush1.msra.mxu0 %v259
    %279 = vmatprep.subr.mxu0 0.0
    %280 = vmatpush1.msra.mxu0 %v260
    %281 = vmatprep.subr.mxu0 0.0
    %282 = vmatpush1.msra.mxu0 %v261
    %283 = vmatprep.subr.mxu0 0.0
    %284 = vmatpush1.msra.mxu0 %v262
    %285 = vmatprep.subr.mxu0 0.0
    %286 = vmatpush1.msra.mxu0 %v263
    %287 = vmatprep.subr.mxu0 0.0
    %288 = vmatpush1.msra.mxu0 %v264
    %289 = vmatprep.subr.mxu0 0.0
    %290 = vmatpush1.msra.mxu0 %v265
    %291 = vmatprep.subr.mxu0 0.0
    %292 = vmatpush1.msra.mxu0 %v266
    %293 = vmatprep.subr.mxu0 0.0
    %294 = vmatpush1.msra.mxu0 %v267
    %295 = vmatprep.subr.mxu0 0.0
    %296 = vmatpush1.msra.mxu0 %v268
    %297 = vmatprep.subr.mxu0 0.0
    %298 = vmatpush1.msra.mxu0 %v269
    %299 = vmatprep.subr.mxu0 0.0
    %300 = vmatpush1.msra.mxu0 %v270
    %301 = vmatprep.subr.mxu0 0.0
    %302 = vmatpush1.msra.mxu0 %v271
    %303 = vmatprep.subr.mxu0 0.0
    %304 = vmatpush1.msra.mxu0 %v272
    %305 = vmatprep.subr.mxu0 0.0
    %306 = vmatpush1.msra.mxu0 0.0
    %307 = vmatprep.subr.mxu0 0.0
    %308 = vmatpush1.msra.mxu0 0.0
    %309 = vmatprep.subr.mxu0 0.0
    %310 = vmatpush1.msra.mxu0 0.0
    %311 = vmatprep.subr.mxu0 0.0
    %312 = vmatpush1.msra.mxu0 0.0
    %313 = vmatprep.subr.mxu0 0.0
    %314 = vmatpush1.msra.mxu0 0.0
    %315 = vmatprep.subr.mxu0 0.0
    %316 = vmatpush1.msra.mxu0 0.0
    %317 = vmatprep.subr.mxu0 0.0
    %318 = vmatpush1.msra.mxu0 0.0
    %319 = vmatprep.subr.mxu0 0.0
    %320 = vmatpush1.msra.mxu0 0.0
    %321 = vmatprep.subr.mxu0 0.0
    %322 = vmatpush1.msra.mxu0 0.0
    %323 = vmatprep.subr.mxu0 0.0
    %324 = vmatpush1.msra.mxu0 0.0
    %325 = vmatprep.subr.mxu0 0.0
    %326 = vmatpush1.msra.mxu0 0.0
    %327 = vmatprep.subr.mxu0 0.0
    %328 = vmatpush1.msra.mxu0 0.0
    %329 = vmatprep.subr.mxu0 0.0
    %330 = vmatpush1.msra.mxu0 0.0
    %331 = vmatprep.subr.mxu0 0.0
    %332 = vmatpush1.msra.mxu0 0.0
    %333 = vmatprep.subr.mxu0 0.0
    %334 = vmatpush1.msra.mxu0 0.0
    %335 = vmatprep.subr.mxu0 0.0
    %336 = vmatpush1.msra.mxu0 0.0
    %337 = vmatprep.mubr.f32.mxu0 0.0
    %338 = vmatmul.mubr.f32.gmra.mrb[0].mxu0 %v249
    %v339 = vpop.f32.mrb[0].mxu0
    %v340 = vadd.f32 0.0, %v339
    %v341 = vpop.f32.mrb[0].mxu0
    %342 = vmatprep.mubr.f32.mxu0 0.0
    %343 = vmatmul.mubr.f32.gmra.mrb[0].mxu0 %v254
    %v344 = vpop.f32.mrb[0].mxu0
    %v345 = vadd.f32 0.0, %v344
    %v346 = vpop.f32.mrb[0].mxu0
    %347 = vdwg.mxu0
    %348 = vst [vmem:[#allocation10] sm:$0xff] %v340
    %349 = vst [vmem:[#allocation10 + $0x8] sm:$0xff] %v345
    // Predicated region
    $region34: #{tpu_custom_call.1} parent=1 // pred_check
      _
    $region35: #{tpu_custom_call.1} parent=1 // pred_check_branch
      %351 = sbr.rel (0) target = $region37
    $region36: #{tpu_custom_call.1} parent=1 // pred_region
      %s353 = ssub.s32 256, 256
      %354 = vsyncadd [#allocation4], %s353
      %s355 = sshll.u32 [#allocation10], 4
      %s356 = int_to_ptr.vmem [resolvable:$true] %s355
      %361 = dma.vmem_to_hbm [thread:$0]  %s356, 256, %s4, [#allocation4], 128, 128, 8
    $region37: #{tpu_custom_call.1} parent=1 // pred_fallthru
      _
    // Predicated region
    $region38: #{tpu_custom_call.1} parent=1 // pred_check
      _
    $region39: #{tpu_custom_call.1} parent=1 // pred_check_branch
      %363 = sbr.rel (0) target = $region41
    $region40: #{tpu_custom_call.1} parent=1 // pred_region
      %364 = dma.done [#allocation4], 256
    $region41: #{tpu_custom_call.1} parent=1 // pred_fallthru
      _
    %365 = vsyncpa [#allocation3], 1
    %366 = vsyncpa [#allocation6], 1
    %367 = vsyncpa [#allocation9], 1
    %368 = vsyncpa [#allocation4], 1

// kernel: tpu_custom_call.1
$region0: #{tpu_custom_call.1}
  #allocation0 [shape = 'u32[]', space=smem, size = 0x4, offset = 0x4, fixed_abs, tag = 'smem constant byte address 0x4 - core index']
  #allocation1 [shape = 'u32[144,128]{1,0:T(1,128)}', space=vmem, size = 0x12000, scoped, tag = 'internal scratch']
  %s0 = inlined_call_operand.hbm [shape: f32[16,128], index: 0, kind: input, shape index: {}]
  %s1 = inlined_call_operand.hbm [shape: f32[128,128], index: 1, kind: input, shape index: {}]
  %s2 = inlined_call_operand.hbm [shape: f32[128,128], index: 2, kind: input, shape index: {}]
  %s3 = inlined_call_operand.hbm [shape: f32[128,128], index: 3, kind: input, shape index: {}]
  %s4 = inlined_call_operand.hbm [shape: f32[16,128], index: 4, kind: output, shape index: {}]
  %s5 = sld [smem:[#allocation0]]
  $region42: #{tpu_custom_call.1} parent=0
    _
  %s7 = ssub.s32 1, %s5
  %s8 = scalar_select 0, %s7, %s5
  $region1: #{tpu_custom_call.1} parent=0
    #allocation2 [shape = 'u8[8192]{0}', space=vmem, size = 0x2000, scoped, tag = 'input window, operand 0, single buffered']
    #allocation3 [shape = 's32[1]{0}', space=sflag, size = 0x4, scoped, tag = 'scoped memory for tpu_custom_call.1']
    #allocation4 [shape = 's32[1]{0}', space=sflag, size = 0x4, scoped, tag = 'scoped memory for tpu_custom_call.1']
    #allocation5 [shape = 'u8[65536]{0}', space=vmem, size = 0x10000, scoped, tag = 'input window, operand 1, single buffered']
    #allocation6 [shape = 's32[1]{0}', space=sflag, size = 0x4, scoped, tag = 'scoped memory for tpu_custom_call.1']
    #allocation7 [shape = 'u8[65536]{0}', space=vmem, size = 0x10000, scoped, tag = 'input window, operand 2, single buffered']
    #allocation8 [shape = 'u8[65536]{0}', space=vmem, size = 0x10000, scoped, tag = 'input window, operand 3, single buffered']
    #allocation9 [shape = 's32[1]{0}', space=sflag, size = 0x4, scoped, tag = 'scoped memory for tpu_custom_call.1']
    #allocation10 [shape = 'u8[8192]{0}', space=vmem, size = 0x2000, scoped, tag = 'output window, operand 0, single buffered']
    %9 = vsyncpa [#allocation3], 0
    %10 = vsyncpa [#allocation6], 0
    %11 = vsyncpa [#allocation9], 0
    %12 = vsyncpa [#allocation4], 0
    // Predicated region
    $region2: #{tpu_custom_call.1} parent=1 // pred_check
      _
    $region3: #{tpu_custom_call.1} parent=1 // pred_check_branch
      %14 = sbr.rel (0) target = $region5
    $region4: #{tpu_custom_call.1} parent=1 // pred_region
      %s16 = ssub.s32 256, 256
      %17 = vsyncadd [#allocation3], %s16
      %s18 = sshll.u32 [#allocation2], 4
      %s19 = int_to_ptr.vmem [resolvable:$true] %s18
      %24 = dma.hbm_to_vmem [thread:$0]  %s0, 256, %s19, [#allocation3], 128, 128, 8
    $region5: #{tpu_custom_call.1} parent=1 // pred_fallthru
      _
    // Predicated region
    $region6: #{tpu_custom_call.1} parent=1 // pred_check
      _
    $region7: #{tpu_custom_call.1} parent=1 // pred_check_branch
      %26 = sbr.rel (0) target = $region9
    $region8: #{tpu_custom_call.1} parent=1 // pred_region
      %s28 = ssub.s32 2048, 2048
      %29 = vsyncadd [#allocation6], %s28
      %s30 = sshll.u32 [#allocation5], 4
      %s31 = int_to_ptr.vmem [resolvable:$true] %s30
      %36 = dma.hbm_to_vmem [thread:$0]  %s1, 2048, %s31, [#allocation6], 128, 128, 8
    $region9: #{tpu_custom_call.1} parent=1 // pred_fallthru
      _
    // Predicated region
    $region10: #{tpu_custom_call.1} parent=1 // pred_check
      _
    $region11: #{tpu_custom_call.1} parent=1 // pred_check_branch
      %38 = sbr.rel (0) target = $region13
    $region12: #{tpu_custom_call.1} parent=1 // pred_region
      %s40 = ssub.s32 2048, 2048
      %41 = vsyncadd [#allocation6], %s40
      %s42 = sshll.u32 [#allocation7], 4
      %s43 = int_to_ptr.vmem [resolvable:$true] %s42
      %48 = dma.hbm_to_vmem [thread:$0]  %s2, 2048, %s43, [#allocation6], 128, 128, 8
    $region13: #{tpu_custom_call.1} parent=1 // pred_fallthru
      _
    // Predicated region
    $region14: #{tpu_custom_call.1} parent=1 // pred_check
      _
    $region15: #{tpu_custom_call.1} parent=1 // pred_check_branch
      %50 = sbr.rel (0) target = $region17
    $region16: #{tpu_custom_call.1} parent=1 // pred_region
      %s52 = ssub.s32 2048, 2048
      %53 = vsyncadd [#allocation9], %s52
      %s54 = sshll.u32 [#allocation8], 4
      %s55 = int_to_ptr.vmem [resolvable:$true] %s54
      %60 = dma.hbm_to_vmem [thread:$0]  %s3, 2048, %s55, [#allocation9], 128, 128, 8
    $region17: #{tpu_custom_call.1} parent=1 // pred_fallthru
      _
    // Predicated region
    $region18: #{tpu_custom_call.1} parent=1 // pred_check
      _
    $region19: #{tpu_custom_call.1} parent=1 // pred_check_branch
      %62 = sbr.rel (0) target = $region21
    $region20: #{tpu_custom_call.1} parent=1 // pred_region
      %63 = dma.done [#allocation3], 256
    $region21: #{tpu_custom_call.1} parent=1 // pred_fallthru
      _
    // Predicated region
    $region22: #{tpu_custom_call.1} parent=1 // pred_check
      _
    $region23: #{tpu_custom_call.1} parent=1 // pred_check_branch
      %65 = sbr.rel (0) target = $region25
    $region24: #{tpu_custom_call.1} parent=1 // pred_region
      %66 = dma.done [#allocation6], 2048
    $region25: #{tpu_custom_call.1} parent=1 // pred_fallthru
      _
    // Predicated region
    $region26: #{tpu_custom_call.1} parent=1 // pred_check
      _
    $region27: #{tpu_custom_call.1} parent=1 // pred_check_branch
      %68 = sbr.rel (0) target = $region29
    $region28: #{tpu_custom_call.1} parent=1 // pred_region
      %69 = dma.done [#allocation6], 2048
    $region29: #{tpu_custom_call.1} parent=1 // pred_fallthru
      _
    // Predicated region
    $region30: #{tpu_custom_call.1} parent=1 // pred_check
      _
    $region31: #{tpu_custom_call.1} parent=1 // pred_check_branch
      %71 = sbr.rel (0) target = $region33
    $region32: #{tpu_custom_call.1} parent=1 // pred_region
      %72 = dma.done [#allocation9], 2048
    $region33: #{tpu_custom_call.1} parent=1 // pred_fallthru
      _
    %v73 = vld [vmem:[#allocation2] sm:$0xff]
    %v74 = vld [vmem:[#allocation2 + $0x8] sm:$0xff]
    %v75 = vld [vmem:[#allocation5] sm:$0xff]
    %v76 = vld [vmem:[#allocation5 + $0x8] sm:$0xff]
    %v77 = vld [vmem:[#allocation5 + $0x10] sm:$0xff]
    %v78 = vld [vmem:[#allocation5 + $0x18] sm:$0xff]
    %v79 = vld [vmem:[#allocation5 + $0x20] sm:$0xff]
    %v80 = vld [vmem:[#allocation5 + $0x28] sm:$0xff]
    %v81 = vld [vmem:[#allocation5 + $0x30] sm:$0xff]
    %v82 = vld [vmem:[#allocation5 + $0x38] sm:$0xff]
    %v83 = vld [vmem:[#allocation5 + $0x40] sm:$0xff]
    %v84 = vld [vmem:[#allocation5 + $0x48] sm:$0xff]
    %v85 = vld [vmem:[#allocation5 + $0x50] sm:$0xff]
    %v86 = vld [vmem:[#allocation5 + $0x58] sm:$0xff]
    %v87 = vld [vmem:[#allocation5 + $0x60] sm:$0xff]
    %v88 = vld [vmem:[#allocation5 + $0x68] sm:$0xff]
    %v89 = vld [vmem:[#allocation5 + $0x70] sm:$0xff]
    %v90 = vld [vmem:[#allocation5 + $0x78] sm:$0xff]
    %91 = vmatprep.subr.mxu0 0.0
    %92 = vmatpush1.msra.mxu0 %v75
    %93 = vmatprep.subr.mxu0 0.0
    %94 = vmatpush1.msra.mxu0 %v76
    %95 = vmatprep.subr.mxu0 0.0
    %96 = vmatpush1.msra.mxu0 %v77
    %97 = vmatprep.subr.mxu0 0.0
    %98 = vmatpush1.msra.mxu0 %v78
    %99 = vmatprep.subr.mxu0 0.0
    %100 = vmatpush1.msra.mxu0 %v79
    %101 = vmatprep.subr.mxu0 0.0
    %102 = vmatpush1.msra.mxu0 %v80
    %103 = vmatprep.subr.mxu0 0.0
    %104 = vmatpush1.msra.mxu0 %v81
    %105 = vmatprep.subr.mxu0 0.0
    %106 = vmatpush1.msra.mxu0 %v82
    %107 = vmatprep.subr.mxu0 0.0
    %108 = vmatpush1.msra.mxu0 %v83
    %109 = vmatprep.subr.mxu0 0.0
    %110 = vmatpush1.msra.mxu0 %v84
    %111 = vmatprep.subr.mxu0 0.0
    %112 = vmatpush1.msra.mxu0 %v85
    %113 = vmatprep.subr.mxu0 0.0
    %114 = vmatpush1.msra.mxu0 %v86
    %115 = vmatprep.subr.mxu0 0.0
    %116 = vmatpush1.msra.mxu0 %v87
    %117 = vmatprep.subr.mxu0 0.0
    %118 = vmatpush1.msra.mxu0 %v88
    %119 = vmatprep.subr.mxu0 0.0
    %120 = vmatpush1.msra.mxu0 %v89
    %121 = vmatprep.subr.mxu0 0.0
    %122 = vmatpush1.msra.mxu0 %v90
    %123 = vmatprep.subr.mxu0 0.0
    %124 = vmatpush1.msra.mxu0 0.0
    %125 = vmatprep.subr.mxu0 0.0
    %126 = vmatpush1.msra.mxu0 0.0
    %127 = vmatprep.subr.mxu0 0.0
    %128 = vmatpush1.msra.mxu0 0.0
    %129 = vmatprep.subr.mxu0 0.0
    %130 = vmatpush1.msra.mxu0 0.0
    %131 = vmatprep.subr.mxu0 0.0
    %132 = vmatpush1.msra.mxu0 0.0
    %133 = vmatprep.subr.mxu0 0.0
    %134 = vmatpush1.msra.mxu0 0.0
    %135 = vmatprep.subr.mxu0 0.0
    %136 = vmatpush1.msra.mxu0 0.0
    %137 = vmatprep.subr.mxu0 0.0
    %138 = vmatpush1.msra.mxu0 0.0
    %139 = vmatprep.subr.mxu0 0.0
    %140 = vmatpush1.msra.mxu0 0.0
    %141 = vmatprep.subr.mxu0 0.0
    %142 = vmatpush1.msra.mxu0 0.0
    %143 = vmatprep.subr.mxu0 0.0
    %144 = vmatpush1.msra.mxu0 0.0
    %145 = vmatprep.subr.mxu0 0.0
    %146 = vmatpush1.msra.mxu0 0.0
    %147 = vmatprep.subr.mxu0 0.0
    %148 = vmatpush1.msra.mxu0 0.0
    %149 = vmatprep.subr.mxu0 0.0
    %150 = vmatpush1.msra.mxu0 0.0
    %151 = vmatprep.subr.mxu0 0.0
    %152 = vmatpush1.msra.mxu0 0.0
    %153 = vmatprep.subr.mxu0 0.0
    %154 = vmatpush1.msra.mxu0 0.0
    %155 = vmatprep.mubr.f32.mxu0 0.0
    %156 = vmatmul.mubr.f32.gmra.mrb[0].mxu0 %v73
    %v157 = vpop.f32.mrb[0].mxu0
    %v158 = vadd.f32 0.0, %v157
    %v159 = vpop.f32.mrb[0].mxu0
    %160 = vmatprep.mubr.f32.mxu0 0.0
    %161 = vmatmul.mubr.f32.gmra.mrb[0].mxu0 %v74
    %v162 = vpop.f32.mrb[0].mxu0
    %v163 = vadd.f32 0.0, %v162
    %v164 = vpop.f32.mrb[0].mxu0
    %165 = vdwg.mxu0
    %v166 = vld [vmem:[#allocation7] sm:$0xff]
    %v167 = vld [vmem:[#allocation7 + $0x8] sm:$0xff]
    %v168 = vld [vmem:[#allocation7 + $0x10] sm:$0xff]
    %v169 = vld [vmem:[#allocation7 + $0x18] sm:$0xff]
    %v170 = vld [vmem:[#allocation7 + $0x20] sm:$0xff]
    %v171 = vld [vmem:[#allocation7 + $0x28] sm:$0xff]
    %v172 = vld [vmem:[#allocation7 + $0x30] sm:$0xff]
    %v173 = vld [vmem:[#allocation7 + $0x38] sm:$0xff]
    %v174 = vld [vmem:[#allocation7 + $0x40] sm:$0xff]
    %v175 = vld [vmem:[#allocation7 + $0x48] sm:$0xff]
    %v176 = vld [vmem:[#allocation7 + $0x50] sm:$0xff]
    %v177 = vld [vmem:[#allocation7 + $0x58] sm:$0xff]
    %v178 = vld [vmem:[#allocation7 + $0x60] sm:$0xff]
    %v179 = vld [vmem:[#allocation7 + $0x68] sm:$0xff]
    %v180 = vld [vmem:[#allocation7 + $0x70] sm:$0xff]
    %v181 = vld [vmem:[#allocation7 + $0x78] sm:$0xff]
    %182 = vmatprep.subr.mxu0 0.0
    %183 = vmatpush1.msra.mxu0 %v166
    %184 = vmatprep.subr.mxu0 0.0
    %185 = vmatpush1.msra.mxu0 %v167
    %186 = vmatprep.subr.mxu0 0.0
    %187 = vmatpush1.msra.mxu0 %v168
    %188 = vmatprep.subr.mxu0 0.0
    %189 = vmatpush1.msra.mxu0 %v169
    %190 = vmatprep.subr.mxu0 0.0
    %191 = vmatpush1.msra.mxu0 %v170
    %192 = vmatprep.subr.mxu0 0.0
    %193 = vmatpush1.msra.mxu0 %v171
    %194 = vmatprep.subr.mxu0 0.0
    %195 = vmatpush1.msra.mxu0 %v172
    %196 = vmatprep.subr.mxu0 0.0
    %197 = vmatpush1.msra.mxu0 %v173
    %198 = vmatprep.subr.mxu0 0.0
    %199 = vmatpush1.msra.mxu0 %v174
    %200 = vmatprep.subr.mxu0 0.0
    %201 = vmatpush1.msra.mxu0 %v175
    %202 = vmatprep.subr.mxu0 0.0
    %203 = vmatpush1.msra.mxu0 %v176
    %204 = vmatprep.subr.mxu0 0.0
    %205 = vmatpush1.msra.mxu0 %v177
    %206 = vmatprep.subr.mxu0 0.0
    %207 = vmatpush1.msra.mxu0 %v178
    %208 = vmatprep.subr.mxu0 0.0
    %209 = vmatpush1.msra.mxu0 %v179
    %210 = vmatprep.subr.mxu0 0.0
    %211 = vmatpush1.msra.mxu0 %v180
    %212 = vmatprep.subr.mxu0 0.0
    %213 = vmatpush1.msra.mxu0 %v181
    %214 = vmatprep.subr.mxu0 0.0
    %215 = vmatpush1.msra.mxu0 0.0
    %216 = vmatprep.subr.mxu0 0.0
    %217 = vmatpush1.msra.mxu0 0.0
    %218 = vmatprep.subr.mxu0 0.0
    %219 = vmatpush1.msra.mxu0 0.0
    %220 = vmatprep.subr.mxu0 0.0
    %221 = vmatpush1.msra.mxu0 0.0
    %222 = vmatprep.subr.mxu0 0.0
    %223 = vmatpush1.msra.mxu0 0.0
    %224 = vmatprep.subr.mxu0 0.0
    %225 = vmatpush1.msra.mxu0 0.0
    %226 = vmatprep.subr.mxu0 0.0
    %227 = vmatpush1.msra.mxu0 0.0
    %228 = vmatprep.subr.mxu0 0.0
    %229 = vmatpush1.msra.mxu0 0.0
    %230 = vmatprep.subr.mxu0 0.0
    %231 = vmatpush1.msra.mxu0 0.0
    %232 = vmatprep.subr.mxu0 0.0
    %233 = vmatpush1.msra.mxu0 0.0
    %234 = vmatprep.subr.mxu0 0.0
    %235 = vmatpush1.msra.mxu0 0.0
    %236 = vmatprep.subr.mxu0 0.0
    %237 = vmatpush1.msra.mxu0 0.0
    %238 = vmatprep.subr.mxu0 0.0
    %239 = vmatpush1.msra.mxu0 0.0
    %240 = vmatprep.subr.mxu0 0.0
    %241 = vmatpush1.msra.mxu0 0.0
    %242 = vmatprep.subr.mxu0 0.0
    %243 = vmatpush1.msra.mxu0 0.0
    %244 = vmatprep.subr.mxu0 0.0
    %245 = vmatpush1.msra.mxu0 0.0
    %246 = vmatprep.mubr.f32.mxu0 0.0
    %247 = vmatmul.mubr.f32.gmra.mrb[0].mxu0 %v158
    %v248 = vpop.f32.mrb[0].mxu0
    %v249 = vadd.f32 0.0, %v248
    %v250 = vpop.f32.mrb[0].mxu0
    %251 = vmatprep.mubr.f32.mxu0 0.0
    %252 = vmatmul.mubr.f32.gmra.mrb[0].mxu0 %v163
    %v253 = vpop.f32.mrb[0].mxu0
    %v254 = vadd.f32 0.0, %v253
    %v255 = vpop.f32.mrb[0].mxu0
    %256 = vdwg.mxu0
    %v257 = vld [vmem:[#allocation8] sm:$0xff]
    %v258 = vld [vmem:[#allocation8 + $0x8] sm:$0xff]
    %v259 = vld [vmem:[#allocation8 + $0x10] sm:$0xff]
    %v260 = vld [vmem:[#allocation8 + $0x18] sm:$0xff]
    %v261 = vld [vmem:[#allocation8 + $0x20] sm:$0xff]
    %v262 = vld [vmem:[#allocation8 + $0x28] sm:$0xff]
    %v263 = vld [vmem:[#allocation8 + $0x30] sm:$0xff]
    %v264 = vld [vmem:[#allocation8 + $0x38] sm:$0xff]
    %v265 = vld [vmem:[#allocation8 + $0x40] sm:$0xff]
    %v266 = vld [vmem:[#allocation8 + $0x48] sm:$0xff]
    %v267 = vld [vmem:[#allocation8 + $0x50] sm:$0xff]
    %v268 = vld [vmem:[#allocation8 + $0x58] sm:$0xff]
    %v269 = vld [vmem:[#allocation8 + $0x60] sm:$0xff]
    %v270 = vld [vmem:[#allocation8 + $0x68] sm:$0xff]
    %v271 = vld [vmem:[#allocation8 + $0x70] sm:$0xff]
    %v272 = vld [vmem:[#allocation8 + $0x78] sm:$0xff]
    %273 = vmatprep.subr.mxu0 0.0
    %274 = vmatpush1.msra.mxu0 %v257
    %275 = vmatprep.subr.mxu0 0.0
    %276 = vmatpush1.msra.mxu0 %v258
    %277 = vmatprep.subr.mxu0 0.0
    %278 = vmatpush1.msra.mxu0 %v259
    %279 = vmatprep.subr.mxu0 0.0
    %280 = vmatpush1.msra.mxu0 %v260
    %281 = vmatprep.subr.mxu0 0.0
    %282 = vmatpush1.msra.mxu0 %v261
    %283 = vmatprep.subr.mxu0 0.0
    %284 = vmatpush1.msra.mxu0 %v262
    %285 = vmatprep.subr.mxu0 0.0
    %286 = vmatpush1.msra.mxu0 %v263
    %287 = vmatprep.subr.mxu0 0.0
    %288 = vmatpush1.msra.mxu0 %v264
    %289 = vmatprep.subr.mxu0 0.0
    %290 = vmatpush1.msra.mxu0 %v265
    %291 = vmatprep.subr.mxu0 0.0
    %292 = vmatpush1.msra.mxu0 %v266
    %293 = vmatprep.subr.mxu0 0.0
    %294 = vmatpush1.msra.mxu0 %v267
    %295 = vmatprep.subr.mxu0 0.0
    %296 = vmatpush1.msra.mxu0 %v268
    %297 = vmatprep.subr.mxu0 0.0
    %298 = vmatpush1.msra.mxu0 %v269
    %299 = vmatprep.subr.mxu0 0.0
    %300 = vmatpush1.msra.mxu0 %v270
    %301 = vmatprep.subr.mxu0 0.0
    %302 = vmatpush1.msra.mxu0 %v271
    %303 = vmatprep.subr.mxu0 0.0
    %304 = vmatpush1.msra.mxu0 %v272
    %305 = vmatprep.subr.mxu0 0.0
    %306 = vmatpush1.msra.mxu0 0.0
    %307 = vmatprep.subr.mxu0 0.0
    %308 = vmatpush1.msra.mxu0 0.0
    %309 = vmatprep.subr.mxu0 0.0
    %310 = vmatpush1.msra.mxu0 0.0
    %311 = vmatprep.subr.mxu0 0.0
    %312 = vmatpush1.msra.mxu0 0.0
    %313 = vmatprep.subr.mxu0 0.0
    %314 = vmatpush1.msra.mxu0 0.0
    %315 = vmatprep.subr.mxu0 0.0
    %316 = vmatpush1.msra.mxu0 0.0
    %317 = vmatprep.subr.mxu0 0.0
    %318 = vmatpush1.msra.mxu0 0.0
    %319 = vmatprep.subr.mxu0 0.0
    %320 = vmatpush1.msra.mxu0 0.0
    %321 = vmatprep.subr.mxu0 0.0
    %322 = vmatpush1.msra.mxu0 0.0
    %323 = vmatprep.subr.mxu0 0.0
    %324 = vmatpush1.msra.mxu0 0.0
    %325 = vmatprep.subr.mxu0 0.0
    %326 = vmatpush1.msra.mxu0 0.0
    %327 = vmatprep.subr.mxu0 0.0
    %328 = vmatpush1.msra.mxu0 0.0
    %329 = vmatprep.subr.mxu0 0.0
    %330 = vmatpush1.msra.mxu0 0.0
    %331 = vmatprep.subr.mxu0 0.0
    %332 = vmatpush1.msra.mxu0 0.0
    %333 = vmatprep.subr.mxu0 0.0
    %334 = vmatpush1.msra.mxu0 0.0
    %335 = vmatprep.subr.mxu0 0.0
    %336 = vmatpush1.msra.mxu0 0.0
    %337 = vmatprep.mubr.f32.mxu0 0.0
    %338 = vmatmul.mubr.f32.gmra.mrb[0].mxu0 %v249
    %v339 = vpop.f32.mrb[0].mxu0
    %v340 = vadd.f32 0.0, %v339
    %v341 = vpop.f32.mrb[0].mxu0
    %342 = vmatprep.mubr.f32.mxu0 0.0
    %343 = vmatmul.mubr.f32.gmra.mrb[0].mxu0 %v254
    %v344 = vpop.f32.mrb[0].mxu0
    %v345 = vadd.f32 0.0, %v344
    %v346 = vpop.f32.mrb[0].mxu0
    %347 = vdwg.mxu0
    %348 = vst [vmem:[#allocation10] sm:$0xff] %v340
    %349 = vst [vmem:[#allocation10 + $0x8] sm:$0xff] %v345
    // Predicated region
    $region34: #{tpu_custom_call.1} parent=1 // pred_check
      _
    $region35: #{tpu_custom_call.1} parent=1 // pred_check_branch
      %351 = sbr.rel (0) target = $region37
    $region36: #{tpu_custom_call.1} parent=1 // pred_region
      %s353 = ssub.s32 256, 256
      %354 = vsyncadd [#allocation4], %s353
      %s355 = sshll.u32 [#allocation10], 4
      %s356 = int_to_ptr.vmem [resolvable:$true] %s355
      %361 = dma.vmem_to_hbm [thread:$0]  %s356, 256, %s4, [#allocation4], 128, 128, 8
    $region37: #{tpu_custom_call.1} parent=1 // pred_fallthru
      _
    // Predicated region
    $region38: #{tpu_custom_call.1} parent=1 // pred_check
      _
    $region39: #{tpu_custom_call.1} parent=1 // pred_check_branch
      %363 = sbr.rel (0) target = $region41
    $region40: #{tpu_custom_call.1} parent=1 // pred_region
      %364 = dma.done [#allocation4], 256
    $region41: #{tpu_custom_call.1} parent=1 // pred_fallthru
      _
    %365 = vsyncpa [#allocation3], 1
    %366 = vsyncpa [#allocation6], 1
    %367 = vsyncpa [#allocation9], 1
    %368 = vsyncpa [#allocation4], 1

</llo_original>
